<compile_context>
chip_gen: v6e
topology: v6e:2x2x1
jax: 0.10.0
libtpu: 0.0.40
codegen_flags: <defaults>
</compile_context>

<pallas_src>
import functools

import jax
import jax.numpy as jnp
from jax.experimental import pallas as pl
from jax.experimental.pallas import tpu as pltpu


def _cdiv(a, b):
    return -(-a // b)


def _round_up(a, b):
    return _cdiv(a, b) * b


def _label_classifier_kernel(emb_ref, att_ref, w_ref, out_ref, *,
                             num_labels, block_n, mask_cols, compute_dtype):
    # emb_ref: (TM, D) input dtype     att_ref: (TM, 1) f32
    # w_ref:   (D, TN) compute dtype   out_ref: (TM, TN) out dtype
    x = emb_ref[...]
    if x.dtype != compute_dtype:
        x = x.astype(compute_dtype)                       # in-kernel bf16 cast
    logits = jnp.dot(x, w_ref[...], preferred_element_type=jnp.float32)  # MXU
    valid = att_ref[...] > 0.5                            # (TM, 1) row validity
    if mask_cols:
        # Also force padded label lanes (col >= num_labels) to -inf so the
        # padded output is safe to consume even without the column slice.
        col = (pl.program_id(1) * block_n
               + jax.lax.broadcasted_iota(jnp.int32, logits.shape, 1))
        keep = valid & (col < num_labels)
    else:
        keep = valid
    out_ref[...] = jnp.where(keep, logits, -jnp.inf).astype(out_ref.dtype)


def label_classifier_forward(emb_sentences, att_sentences, weight, *,
                             tm_max=1024, tn_max=2048,
                             compute_dtype=jnp.bfloat16,
                             out_dtype=jnp.float32,
                             min_row_tiles=2):
    """emb_sentences: (B, S, D); att_sentences: (B, S) bool;
    weight: (L, D) = PyTorch nn.Linear(D, L, bias=False).weight.
    Returns logits (B, S, L) in out_dtype with -inf at masked-out positions."""
    B, S, D = emb_sentences.shape
    L, D2 = weight.shape
    assert D2 == D, "weight must be (num_labels, input_dim)"
    compute_dtype = jnp.dtype(compute_dtype)
    out_dtype = jnp.dtype(out_dtype)

    M = B * S
    L_pad = _round_up(L, 128)                       # lane-dense output width

    # ---- label (column) tiling: only kicks in for very large D * L_pad ----
    tn_max = max(128, (tn_max // 128) * 128)
    TN = min(L_pad, tn_max)
    n_l = _cdiv(L_pad, TN)

    # ---- row tiling: multiple of 8, VMEM-budgeted, >= min_row_tiles blocks ----
    tm_max = max(8, (tm_max // 8) * 8)
    emb_bytes = jnp.dtype(emb_sentences.dtype).itemsize
    out_bytes = out_dtype.itemsize
    w_bytes = compute_dtype.itemsize
    weight_resident = D * TN * w_bytes * (1 if n_l == 1 else 2)
    tile_budget = 40 * 1024 * 1024                  # headroom even on v7x (64 MiB)
    per_row = 2 * (D * emb_bytes + TN * out_bytes + 4)   # double-buffered tiles
    tm_budget = max(8, ((tile_budget - weight_resident) // per_row) // 8 * 8)
    tm_cap = max(8, min(tm_max, tm_budget))
    n_m_target = max(min_row_tiles, _cdiv(M, tm_cap))    # >=2 blocks -> both v7x TCs
    TM = max(8, min(tm_cap, _round_up(_cdiv(M, n_m_target), 8)))
    n_m = _cdiv(M, TM)

    # ---- inputs: no extra emb passes (f32 straight in, cast in-kernel) ----
    emb_flat = emb_sentences.reshape(M, D)                 # free reshape, no cast
    att_col = att_sentences.reshape(M, 1).astype(jnp.float32)
    w_t = weight.T.astype(compute_dtype)                   # (D, L), tiny one-time
    if L_pad != L:
        w_t = jnp.pad(w_t, ((0, 0), (0, L_pad - L)))       # zero-pad label lanes

    kernel = functools.partial(
        _label_classifier_kernel,
        num_labels=L, block_n=TN, mask_cols=(L_pad != L),
        compute_dtype=compute_dtype)

    # Grid-invariant weight (n_l == 1): single-buffer it to halve its VMEM.
    if n_l == 1:
        w_spec = pl.BlockSpec((D, TN), lambda m, j: (0, j),
                              pipeline_mode=pl.Buffered(1))
    else:
        w_spec = pl.BlockSpec((D, TN), lambda m, j: (0, j))

    vmem_needed = (2 * TM * D * emb_bytes + 2 * TM * TN * out_bytes
                   + weight_resident + 2 * TM * 4)
    try:
        phys_vmem = int(pltpu.get_tpu_info().vmem_capacity_bytes)
    except Exception:
        phys_vmem = 64 * 1024 * 1024                       # v7x lower bound
    vmem_limit = min(max(32 * 1024 * 1024, int(vmem_needed) * 3 // 2),
                     phys_vmem * 7 // 8)

    out = pl.pallas_call(
        kernel,
        out_shape=jax.ShapeDtypeStruct((M, L_pad), out_dtype),
        grid_spec=pltpu.PrefetchScalarGridSpec(
            num_scalar_prefetch=0,
            grid=(n_m, n_l),
            in_specs=[
                pl.BlockSpec((TM, D), lambda m, j: (m, 0)),    # emb rows (f32)
                pl.BlockSpec((TM, 1), lambda m, j: (m, 0)),    # mask column
                w_spec,                                        # weight (D, TN)
            ],
            out_specs=pl.BlockSpec((TM, TN), lambda m, j: (m, j)),
        ),
        compiler_params=pltpu.CompilerParams(
            dimension_semantics=("parallel", "parallel"),
            vmem_limit_bytes=int(vmem_limit),
        ),
    )(emb_flat, att_col, w_t)

    if L_pad != L:
        # Padded lanes are already -inf; the slice only restores the module's
        # exact (B, S, L) contract for downstream consumers.
        out = out[:, :L]
    return out.reshape(B, S, L)


if __name__ == "__main__":
    # Small shapes consistent with the module: batch=2, seq=8, hidden=32, labels=16.
    B, S, D, L = 2, 8, 32, 16
    root_label = 0  # unused in forward()

    key = jax.random.PRNGKey(0)
    k_emb, k_w = jax.random.split(key)

    emb = jax.random.normal(k_emb, (B, S, D), dtype=jnp.float32)
    # Deterministic attention mask: sentence 0 has 8 valid tokens, sentence 1 has 5.
    lengths = jnp.array([8, 5], dtype=jnp.int32)
    att = (jnp.arange(S)[None, :] < lengths[:, None])          # (B, S) bool

    # nn.Linear(input_dim, num_labels, bias=False): weight shape (L, D).
    w = jax.random.normal(k_w, (L, D), dtype=jnp.float32) * 0.05

    logits = label_classifier_forward(emb, att, w)
    logits = jax.block_until_ready(logits)

    # Reference with the same bf16-rounded matmul operands, f32 accumulation.
    emb_bf = emb.astype(jnp.bfloat16).astype(jnp.float32)
    w_bf = w.astype(jnp.bfloat16).astype(jnp.float32)
    ref = jnp.where(att[..., None], jnp.einsum("bsd,ld->bsl", emb_bf, w_bf), -jnp.inf)

    valid = att[..., None]
    assert logits.shape == (B, S, L) and logits.dtype == jnp.float32
    # Masked-out positions must be exactly -inf; valid positions finite & correct.
    assert bool(jnp.all(jnp.where(valid, jnp.isfinite(logits), jnp.isneginf(logits))))
    assert bool(jnp.allclose(jnp.where(valid, logits, 0.0),
                             jnp.where(valid, ref, 0.0), atol=1e-3, rtol=1e-3))

    # bf16-output path (halves the dominant logits write stream on mem-bound shapes).
    logits_bf16 = jax.block_until_ready(
        label_classifier_forward(emb, att, w, out_dtype=jnp.bfloat16))
    assert logits_bf16.shape == (B, S, L) and logits_bf16.dtype == jnp.bfloat16
    assert bool(jnp.all(jnp.where(valid, jnp.isfinite(logits_bf16),
                                  jnp.isneginf(logits_bf16))))
    assert bool(jnp.allclose(jnp.where(valid, logits_bf16.astype(jnp.float32), 0.0),
                             jnp.where(valid, ref, 0.0), atol=2e-2, rtol=2e-2))

    print("KERNEL_OK")
</pallas_src>

<mosaic_0001>
module attributes {stable_mosaic.version = 11 : i64} {
  func.func @_label_classifier_kernel(%arg0: i32, %arg1: i32, %arg2: memref<8x32xf32, #tpu.memory_space<vmem>>, %arg3: memref<8x1xf32, #tpu.memory_space<vmem>>, %arg4: memref<32x128xbf16, #tpu.memory_space<vmem>>, %arg5: memref<8x128xf32, #tpu.memory_space<vmem>>) attributes {dimension_semantics = [#tpu.dimension_semantics<parallel>, #tpu.dimension_semantics<parallel>], iteration_bounds = array<i64: 2, 1>, scalar_prefetch = 0 : i64, scratch_operands = 0 : i64, tpu.core_type = #tpu.core_type<tc>, window_params = [{transform_indices = @transform_0, window_bounds = array<i64: 8, 32>}, {transform_indices = @transform_1, window_bounds = array<i64: 8, 1>}, {pipeline_mode = #tpu.pipeline_mode<synchronous>, transform_indices = @transform_2, window_bounds = array<i64: 32, 128>}, {transform_indices = @transform_3, window_bounds = array<i64: 8, 128>}]} {
    %c0 = arith.constant 0 : index
    %c0_0 = arith.constant 0 : index
    %0 = vector.load %arg2[%c0, %c0_0] : memref<8x32xf32, #tpu.memory_space<vmem>>, vector<8x32xf32>
    %1 = arith.truncf %0 : vector<8x32xf32> to vector<8x32xbf16>
    %c0_1 = arith.constant 0 : index
    %c0_2 = arith.constant 0 : index
    %2 = vector.load %arg4[%c0_1, %c0_2] : memref<32x128xbf16, #tpu.memory_space<vmem>>, vector<32x128xbf16>
    %cst = arith.constant dense<0.000000e+00> : vector<8x128xf32>
    %3 = tpu.matmul %1, %2, %cst {dimension_numbers = #tpu.dot_dimension_numbers<[1], [0], [0], [1], [0, 0, 1, 1], [], []>} : vector<8x32xbf16>, vector<32x128xbf16>, vector<8x128xf32> -> vector<8x128xf32>
    %c0_3 = arith.constant 0 : index
    %c0_4 = arith.constant 0 : index
    %4 = vector.load %arg3[%c0_3, %c0_4] : memref<8x1xf32, #tpu.memory_space<vmem>>, vector<8x1xf32>
    %cst_5 = arith.constant 5.000000e-01 : f32
    %5 = vector.broadcast %cst_5 : f32 to vector<8x1xf32>
    %6 = arith.cmpf ogt, %4, %5 : vector<8x1xf32>
    %c128_i32 = arith.constant 128 : i32
    %7 = arith.muli %arg1, %c128_i32 : i32
    %8 = tpu.iota {dimensions = array<i32: 1>} : vector<8x128xi32>
    %9 = vector.broadcast %7 : i32 to vector<8x128xi32>
    %10 = arith.addi %9, %8 : vector<8x128xi32>
    %c16_i32 = arith.constant 16 : i32
    %11 = vector.broadcast %c16_i32 : i32 to vector<8x128xi32>
    %12 = arith.cmpi slt, %10, %11 : vector<8x128xi32>
    %13 = vector.broadcast %6 : vector<8x1xi1> to vector<8x128xi1>
    %14 = arith.andi %13, %12 : vector<8x128xi1>
    %cst_6 = arith.constant 0xFF800000 : f32
    %15 = vector.broadcast %cst_6 : f32 to vector<8x128xf32>
    %16 = arith.select %14, %3, %15 : vector<8x128xi1>, vector<8x128xf32>
    %c0_7 = arith.constant 0 : index
    %c0_8 = arith.constant 0 : index
    %17 = vector.load %arg5[%c0_7, %c0_8] : memref<8x128xf32, #tpu.memory_space<vmem>>, vector<8x128xf32>
    tpu.vector_store %arg5[%c0_7, %c0_8], %16 {strides = array<i32>} : memref<8x128xf32, #tpu.memory_space<vmem>>, vector<8x128xf32>,
    return
  }
  func.func @transform_0(%arg0: i32, %arg1: i32) -> (i32, i32) {
    %c0_i32 = arith.constant 0 : i32
    %c0_i32_0 = arith.constant 0 : i32
    return %arg0, %c0_i32 : i32, i32
  }
  func.func @transform_1(%arg0: i32, %arg1: i32) -> (i32, i32) {
    %c0_i32 = arith.constant 0 : i32
    %c0_i32_0 = arith.constant 0 : i32
    return %arg0, %c0_i32 : i32, i32
  }
  func.func @transform_2(%arg0: i32, %arg1: i32) -> (i32, i32) {
    %c0_i32 = arith.constant 0 : i32
    %c0_i32_0 = arith.constant 0 : i32
    return %c0_i32, %arg1 : i32, i32
  }
  func.func @transform_3(%arg0: i32, %arg1: i32) -> (i32, i32) {
    %c0_i32 = arith.constant 0 : i32
    return %arg0, %arg1 : i32, i32
  }
}

</mosaic_0001>

<llo_original>
// kernel: tpu_custom_call.1
$region0: #{tpu_custom_call.1}
  #allocation0 [shape = 'u32[]', space=smem, size = 0x4, offset = 0x4, fixed_abs, tag = 'smem constant byte address 0x4 - core index']
  #allocation1 [shape = 'u32[144,128]{1,0:T(1,128)}', space=vmem, size = 0x12000, scoped, tag = 'internal scratch']
  %s0 = inlined_call_operand.vmem [shape: f32[16,32], index: 0, kind: input, shape index: {}]
  %s1 = inlined_call_operand.vmem [shape: f32[16,1], index: 1, kind: input, shape index: {}]
  %s2 = inlined_call_operand.hbm [shape: bf16[32,128], index: 2, kind: input, shape index: {}]
  %s3 = inlined_call_operand.hbm [shape: f32[16,128], index: 3, kind: output, shape index: {}]
  %s4 = sld [smem:[#allocation0]]
  $region49: #{tpu_custom_call.1} parent=0
    _
  %s6 = ssub.s32 1, %s4
  %s7 = scalar_select 0, %s6, %s4
  $region1: #{tpu_custom_call.1} parent=0
    #allocation2 [shape = 'u8[8192]{0}', space=vmem, size = 0x2000, scoped, tag = 'input window, operand 2, single buffered']
    #allocation3 [shape = 's32[2]{0}', space=sflag, size = 0x8, scoped, tag = 'scoped memory for tpu_custom_call.1']
    #allocation4 [shape = 's32[2]{0}', space=sflag, size = 0x8, scoped, tag = 'scoped memory for tpu_custom_call.1']
    #allocation5 [shape = 'u8[8192]{0}', space=vmem, size = 0x2000, scoped, tag = 'output window, operand 0']
    %8 = vsyncpa [#allocation3], 0
    %9 = vsyncpa [#allocation4], 0
    %s10 = scalar_lea.sflag [#allocation4], 1
    %11 = vsyncpa %s10, 0
    loop: start=0, step=1, limit=4
    $region2: #{tpu_custom_call.1} parent=1 // loop_pre_header
      _
    $region3: #{tpu_custom_call.1} parent=1 // loop_header
      %s13 = sphi 0, %s17
      %p14 = scmp.ge.s32.totalorder %s13, 4
      %s20 = sphi 0, %s32
      %s21 = sphi 0, %s28
      %s22 = sphi 0, %s20
      %s23 = sphi 0, %s21
      %s24 = sphi 0, %s22
      %s25 = sphi 0, %s23
      %s35 = sphi 0, %s37
      %s38 = sphi 0, %s35
      %s39 = sphi 0, %s38
      %s55 = sphi 0, %s39
      %s61 = sphi 0, %s63
      %s64 = sphi 0, %s61
      %s65 = sphi 0, %s64
      %s81 = sphi 0, %s65
      %s87 = sphi 0, %s89
      %s90 = sphi 0, %s87
      %s91 = sphi 0, %s90
      %s107 = sphi 0, %s91
      %s115 = sphi 0, %s117
      %s118 = sphi 0, %s115
      %s119 = sphi 0, %s118
      %s135 = sphi 0, %s119
    $region4: #{tpu_custom_call.1} parent=1 // loop_header_branch
      %16 = sbr.rel (%p14) target = $region8
    $region5: #{tpu_custom_call.1} parent=1 // loop_body
      %s18 = ssub.s32 %s13, 1
      %s19 = ssub.s32 %s13, 2
      %s26 = sadd.s32 1, %s21
      %p27 = scmp.ge.s32.totalorder %s26, 1
      %s28 = scalar_select %p27, 0, %s26
      %s29 = sadd.s32 1, %s20
      %s30 = scalar_select %p27, %s29, %s20
      %p31 = scmp.ge.s32.totalorder %s30, 2
      %s32 = scalar_select %p31, 0, %s30
      %s33 = ssub.s32 %s20, %s32
      %p34 = scmp.eq.s32.totalorder %s33, 0
      %s36 = sadd.s32 %s35, 1
      %s37 = scalar_select %p34, %s35, %s36
      %p40 = pneg %p34
      %p41 = scmp.eq.s32.totalorder %s13, 1
      %p42 = por %p40, %p41
      %p43 = scmp.ne.s32.totalorder %s35, %s38
      %p44 = scmp.eq.s32.totalorder %s13, 0
      %p45 = por %p43, %p44
      %p46 = scmp.ne.s32.totalorder %s35, %s38
      %p47 = scmp.eq.s32.totalorder %s18, 1
      %p48 = por %p46, %p47
      %p49 = scmp.ne.s32.totalorder %s38, %s39
      %p50 = scmp.eq.s32.totalorder %s18, 0
      %p51 = por %p49, %p50
      %p52 = scmp.ne.s32.totalorder %s38, %s39
      %p53 = scmp.eq.s32.totalorder %s19, 1
      %p54 = por %p52, %p53
      %p56 = scmp.ne.s32.totalorder %s39, %s55
      %p57 = scmp.eq.s32.totalorder %s19, 0
      %p58 = por %p56, %p57
      %s59 = ssub.s32 %s20, %s32
      %p60 = scmp.eq.s32.totalorder %s59, 0
      %s62 = sadd.s32 %s61, 1
      %s63 = scalar_select %p60, %s61, %s62
      %p66 = pneg %p60
      %p67 = scmp.eq.s32.totalorder %s13, 1
      %p68 = por %p66, %p67
      %p69 = scmp.ne.s32.totalorder %s61, %s64
      %p70 = scmp.eq.s32.totalorder %s13, 0
      %p71 = por %p69, %p70
      %p72 = scmp.ne.s32.totalorder %s61, %s64
      %p73 = scmp.eq.s32.totalorder %s18, 1
      %p74 = por %p72, %p73
      %p75 = scmp.ne.s32.totalorder %s64, %s65
      %p76 = scmp.eq.s32.totalorder %s18, 0
      %p77 = por %p75, %p76
      %p78 = scmp.ne.s32.totalorder %s64, %s65
      %p79 = scmp.eq.s32.totalorder %s19, 1
      %p80 = por %p78, %p79
      %p82 = scmp.ne.s32.totalorder %s65, %s81
      %p83 = scmp.eq.s32.totalorder %s19, 0
      %p84 = por %p82, %p83
      %s85 = ssub.s32 %s21, %s28
      %p86 = scmp.eq.s32.totalorder %s85, 0
      %s88 = sadd.s32 %s87, 1
      %s89 = scalar_select %p86, %s87, %s88
      %p92 = pneg %p86
      %p93 = scmp.eq.s32.totalorder %s13, 1
      %p94 = por %p92, %p93
      %p95 = scmp.ne.s32.totalorder %s87, %s90
      %p96 = scmp.eq.s32.totalorder %s13, 0
      %p97 = por %p95, %p96
      %p98 = scmp.ne.s32.totalorder %s87, %s90
      %p99 = scmp.eq.s32.totalorder %s18, 1
      %p100 = por %p98, %p99
      %p101 = scmp.ne.s32.totalorder %s90, %s91
      %p102 = scmp.eq.s32.totalorder %s18, 0
      %p103 = por %p101, %p102
      %p104 = scmp.ne.s32.totalorder %s90, %s91
      %p105 = scmp.eq.s32.totalorder %s19, 1
      %p106 = por %p104, %p105
      %p108 = scmp.ne.s32.totalorder %s91, %s107
      %p109 = scmp.eq.s32.totalorder %s19, 0
      %p110 = por %p108, %p109
      %s111 = ssub.s32 %s20, %s32
      %s112 = ssub.s32 %s21, %s28
      %s113 = sor.u32 %s111, %s112
      %p114 = scmp.eq.s32.totalorder %s113, 0
      %s116 = sadd.s32 %s115, 1
      %s117 = scalar_select %p114, %s115, %s116
      %p120 = pneg %p114
      %p121 = scmp.eq.s32.totalorder %s13, 1
      %p122 = por %p120, %p121
      %p123 = scmp.ne.s32.totalorder %s115, %s118
      %p124 = scmp.eq.s32.totalorder %s13, 0
      %p125 = por %p123, %p124
      %p126 = scmp.ne.s32.totalorder %s115, %s118
      %p127 = scmp.eq.s32.totalorder %s18, 1
      %p128 = por %p126, %p127
      %p129 = scmp.ne.s32.totalorder %s118, %s119
      %p130 = scmp.eq.s32.totalorder %s18, 0
      %p131 = por %p129, %p130
      %p132 = scmp.ne.s32.totalorder %s118, %s119
      %p133 = scmp.eq.s32.totalorder %s19, 1
      %p134 = por %p132, %p133
      %p136 = scmp.ne.s32.totalorder %s119, %s135
      %p137 = scmp.eq.s32.totalorder %s19, 0
      %p138 = por %p136, %p137
      %p139 = scmp.le.s32.totalorder 1, %s13
      %p140 = scmp.lt.s32.totalorder %s13, 3
      %p141 = pnand %p139, %p140
      %p142 = pneg %p141
      // Predicated region
      $region9: #{tpu_custom_call.1} parent=5 // pred_check
        _
      $region10: #{tpu_custom_call.1} parent=5 // pred_check_branch
        %144 = sbr.rel (%p141) target = $region12
      $region11: #{tpu_custom_call.1} parent=5 // pred_region
        %s145 = ssub.s32 %s13, 1
        // Predicated region
        $region13: #{tpu_custom_call.1} parent=11 // pred_check
          %p146 = pneg %p103
        $region14: #{tpu_custom_call.1} parent=11 // pred_check_branch
          %148 = sbr.rel (%p146) target = $region16
        $region15: #{tpu_custom_call.1} parent=11 // pred_region
          %s150 = ssub.s32 256, 256
          %151 = vsyncadd [#allocation3], %s150
          %s152 = smul.addr %s23, 64
          %s153 = scalar_lea.hbm %s2, %s152
          %s154 = sshll.u32 [#allocation2], 4
          %s155 = int_to_ptr.vmem [resolvable:$true] %s154
          %160 = dma.hbm_to_vmem [thread:$0]  %s153, 256, %s155, [#allocation3], 64, 64, 4
        $region16: #{tpu_custom_call.1} parent=11 // pred_fallthru
          _
      $region12: #{tpu_custom_call.1} parent=5 // pred_fallthru
        _
      %p161 = scmp.lt.s32.totalorder %s13, 2
      // Predicated region
      $region17: #{tpu_custom_call.1} parent=5 // pred_check
        %p162 = pneg %p161
      $region18: #{tpu_custom_call.1} parent=5 // pred_check_branch
        %164 = sbr.rel (%p162) target = $region20
      $region19: #{tpu_custom_call.1} parent=5 // pred_region
        // Predicated region
        $region21: #{tpu_custom_call.1} parent=19 // pred_check
          %p165 = pneg %p45
        $region22: #{tpu_custom_call.1} parent=19 // pred_check_branch
          %167 = sbr.rel (%p165) target = $region24
        $region23: #{tpu_custom_call.1} parent=19 // pred_region
          %p168 = scmp.lt.s32.totalorder %s20, 1
          %s169 = scalar_select %p168, %s20, 1
          %s170 = smul.addr %s169, 8
          %s171 = scalar_lea.vmem %s0, %s170
        $region24: #{tpu_custom_call.1} parent=19 // pred_fallthru
          _
        // Predicated region
        $region25: #{tpu_custom_call.1} parent=19 // pred_check
          %p172 = pneg %p71
        $region26: #{tpu_custom_call.1} parent=19 // pred_check_branch
          %174 = sbr.rel (%p172) target = $region28
        $region27: #{tpu_custom_call.1} parent=19 // pred_region
          %p175 = scmp.lt.s32.totalorder %s20, 1
          %s176 = scalar_select %p175, %s20, 1
          %s177 = smul.addr %s176, 8
          %s178 = scalar_lea.vmem %s1, %s177
        $region28: #{tpu_custom_call.1} parent=19 // pred_fallthru
          _
      $region20: #{tpu_custom_call.1} parent=5 // pred_fallthru
        _
      %p179 = scmp.le.s32.totalorder 1, %s13
      %p180 = scmp.lt.s32.totalorder %s13, 3
      %p181 = pnand %p179, %p180
      %p182 = pneg %p181
      // Predicated region
      $region29: #{tpu_custom_call.1} parent=5 // pred_check
        _
      $region30: #{tpu_custom_call.1} parent=5 // pred_check_branch
        %184 = sbr.rel (%p181) target = $region32
      $region31: #{tpu_custom_call.1} parent=5 // pred_region
        %s185 = ssub.s32 %s13, 1
        // Predicated region
        $region33: #{tpu_custom_call.1} parent=31 // pred_check
          %p186 = pneg %p103
        $region34: #{tpu_custom_call.1} parent=31 // pred_check_branch
          %188 = sbr.rel (%p186) target = $region36
        $region35: #{tpu_custom_call.1} parent=31 // pred_region
          %189 = dma.done [#allocation3], 256
        $region36: #{tpu_custom_call.1} parent=31 // pred_fallthru
          _
        %p190 = scmp.lt.s32.totalorder %s22, 1
        %s191 = scalar_select %p190, %s22, 1
        %s192 = smul.addr %s191, 8
        %s193 = scalar_lea.vmem %s0, %s192
        %p194 = pneg %p51
        %p195 = pneg %p48
        %p196 = scmp.lt.s32.totalorder %s22, 1
        %s197 = scalar_select %p196, %s22, 1
        %s198 = smul.addr %s197, 8
        %s199 = scalar_lea.vmem %s1, %s198
        %p200 = pneg %p77
        %p201 = pneg %p74
        %p202 = pneg %p103
        %p203 = pneg %p100
        %p204 = pneg %p131
        %p205 = pneg %p128
        %s206 = sand.u32 %s118, 1
        %s207 = scalar_lea.sflag [#allocation4], %s206
        %s208 = sand.u32 %s118, 1
        %s209 = smul.addr %s208, 8
        %s210 = scalar_lea.vmem [#allocation5], %s209
        %p211 = scmp.lt.s32.totalorder %s22, 1
        %s212 = scalar_select %p211, %s22, 1
        %s213 = smul.addr %s212, 8
        %s214 = scalar_lea.vmem %s0, %s213
        %p215 = scmp.lt.s32.totalorder %s22, 1
        %s216 = scalar_select %p215, %s22, 1
        %s217 = smul.addr %s216, 8
        %s218 = scalar_lea.vmem %s1, %s217
        %v220 = vld [vmem:[%s214] sm:$0xff]
        %v221 = vpack.c.bf16 %v220, %v220
        %v222 = vld [vmem:[#allocation2] sm:$0xf]
        %v223 = vld [vmem:[#allocation2 + $0x4] sm:$0xf]
        %v224 = vld [vmem:[#allocation2 + $0x8] sm:$0xf]
        %v225 = vld [vmem:[#allocation2 + $0xc] sm:$0xf]
        %v230 = vunpack.c.l.b16 %v222
        %v231 = vunpack.c.l.b16 %v223
        %v232 = vunpack.c.l.b16 %v224
        %v233 = vunpack.c.l.b16 %v225
        %v234 = vpack.c.b16 %v231, %v230
        %v235 = vpack.c.b16 %v233, %v232
        %vm238 = vcmask 261120
        %v240 = vsel %vm238, %v221, 0
        %242 = vmatprep.subr.bf16.mxu0 0
        %243 = vmatpush1.bf16.msra.mxu0 0
        %244 = vmatprep.subr.bf16.mxu0 0
        %245 = vmatpush1.bf16.msra.mxu0 0
        %246 = vmatprep.subr.bf16.mxu0 0
        %247 = vmatpush1.bf16.msra.mxu0 0
        %248 = vmatprep.subr.bf16.mxu0 0
        %249 = vmatpush1.bf16.msra.mxu0 0
        %250 = vmatprep.subr.bf16.mxu0 0
        %251 = vmatpush1.bf16.msra.mxu0 0
        %252 = vmatprep.subr.bf16.mxu0 0
        %253 = vmatpush1.bf16.msra.mxu0 0
        %254 = vmatprep.subr.bf16.mxu0 0
        %255 = vmatpush1.bf16.msra.mxu0 %v235
        %256 = vmatprep.subr.bf16.mxu0 0
        %257 = vmatpush1.bf16.msra.mxu0 %v234
        %258 = vmatprep.subr.bf16.mxu0 0
        %259 = vmatpush2.bf16.msra.mxu0 0
        %260 = vmatprep.subr.bf16.mxu0 0
        %261 = vmatpush2.bf16.msra.mxu0 0
        %262 = vmatprep.subr.bf16.mxu0 0
        %263 = vmatpush2.bf16.msra.mxu0 0
        %264 = vmatprep.subr.bf16.mxu0 0
        %265 = vmatpush2.bf16.msra.mxu0 0
        %266 = vmatprep.subr.bf16.mxu0 0
        %267 = vmatpush2.bf16.msra.mxu0 0
        %268 = vmatprep.subr.bf16.mxu0 0
        %269 = vmatpush2.bf16.msra.mxu0 0
        %270 = vmatprep.subr.bf16.mxu0 0
        %271 = vmatpush2.bf16.msra.mxu0 0
        %272 = vmatprep.subr.bf16.mxu0 0
        %273 = vmatpush2.bf16.msra.mxu0 0
        %274 = vmatprep.mubr.bf16.mxu0 0
        %275 = vmatmul.mubr.bf16.gmra.mxu0 %v240
        %v276 = vpop.f32.mrf.mxu0
        %v277 = vadd.f32 0.0, %v276
        %v278 = vpop.f32.mrf.mxu0
        %v279 = vpop.f32.mrf.mxu0
        %v280 = vpop.f32.mrf.mxu0
        %281 = vdwg.mxu0
        %v282 = vld [vmem:[%s218] sm:$0xff]
        %vm283 = vcmp.gt.f32.partialorder %v282, 0.5
        %s284 = smul.u32 %s23, 128
        %v285 = vlaneseq
        %v286 = vand.u32 %v285, 127
        %v287 = vstv %s284
        %v288 = vadd.s32 %v287, %v286
        %vm289 = vcmp.lt.s32.totalorder %v288, 16
        %v290 = vsel %vm283, 1, 0
        %291 = vset.pattern.permute.xlu0 0
        %292 = vperm.xlu0 %291, %v290
        %v293 = vpop.permute.xlu0 %292
        %vm294 = vcmp.eq.s32.totalorder %v293, 1
        %vm295 = vmand %vm294, %vm289
        %v296 = vsel %vm295, %v277, -inf
        %297 = vst [vmem:[%s210] sm:$0xff] %v296
        %s298 = sand.u32 %s118, 1
        %s299 = scalar_lea.sflag [#allocation4], %s298
        %s300 = sand.u32 %s118, 1
        %s301 = smul.addr %s300, 8
        %s302 = scalar_lea.vmem [#allocation5], %s301
        // Predicated region
        $region37: #{tpu_custom_call.1} parent=31 // pred_check
          %p303 = pneg %p128
        $region38: #{tpu_custom_call.1} parent=31 // pred_check_branch
          %305 = sbr.rel (%p303) target = $region40
        $region39: #{tpu_custom_call.1} parent=31 // pred_region
          %s307 = ssub.s32 128, 128
          %308 = vsyncadd %s299, %s307
          %s309 = sadd.s32 %s23, %s22
          %s310 = smul.addr %s309, 128
          %s311 = scalar_lea.hbm %s3, %s310
          %s313 = sshll.u32 %s302, 4
          %s314 = int_to_ptr.vmem [resolvable:$true] %s313
          %316 = dma.vmem_to_hbm [thread:$0]  %s314, 128, %s311, %s299
        $region40: #{tpu_custom_call.1} parent=31 // pred_fallthru
          _
      $region32: #{tpu_custom_call.1} parent=5 // pred_fallthru
        _
      %p317 = scmp.le.s32.totalorder 2, %s13
      // Predicated region
      $region41: #{tpu_custom_call.1} parent=5 // pred_check
        %p318 = pneg %p317
      $region42: #{tpu_custom_call.1} parent=5 // pred_check_branch
        %320 = sbr.rel (%p318) target = $region44
      $region43: #{tpu_custom_call.1} parent=5 // pred_region
        %s321 = ssub.s32 %s13, 2
        // Predicated region
        $region45: #{tpu_custom_call.1} parent=43 // pred_check
          %p322 = pneg %p134
        $region46: #{tpu_custom_call.1} parent=43 // pred_check_branch
          %324 = sbr.rel (%p322) target = $region48
        $region47: #{tpu_custom_call.1} parent=43 // pred_region
          %s325 = sand.u32 %s119, 1
          %s326 = scalar_lea.sflag [#allocation4], %s325
          %s327 = sand.u32 %s119, 1
          %s328 = smul.addr %s327, 8
          %s329 = scalar_lea.vmem [#allocation5], %s328
          %330 = dma.done %s326, 128
        $region48: #{tpu_custom_call.1} parent=43 // pred_fallthru
          _
      $region44: #{tpu_custom_call.1} parent=5 // pred_fallthru
        _
    $region6: #{tpu_custom_call.1} parent=1 // loop_footer
      %s17 = sadd.s32 1, %s13
    $region7: #{tpu_custom_call.1} parent=1 // loop_footer_branch
      %12 = sbr.rel target = $region3
    $region8: #{tpu_custom_call.1} parent=1 // loop_exit
      _
    %331 = vsyncpa [#allocation3], 1
    %s332 = scalar_lea.sflag [#allocation3], 1
    %333 = vsyncpa %s332, 1
    %334 = vsyncpa [#allocation4], 1
    %s335 = scalar_lea.sflag [#allocation4], 1
    %336 = vsyncpa %s335, 1

</llo_original>
